<compile_context>
chip_gen: v6e
topology: v6e:2x2x1
jax: 0.10.0
libtpu: 0.0.40
codegen_flags: <defaults>
</compile_context>

<pallas_src>
import math
import numpy as np
import jax
import jax.numpy as jnp
from jax.experimental import pallas as pl
from jax.experimental.pallas import tpu as pltpu  # noqa: F401  (TPU backend)

# ---------------- config ----------------
BATCH = 8
INPUT_DIM = 16
HV0, HV1 = 32, 32            # critic hidden widths
HA0, HA1 = 32, 32            # actor hidden widths
NUM_ACTIONS = 4
INIT_STD = 0.5
MIN_STD = 0.003
BN_EPS = 1e-5

WIDE = 128                   # lane-dense width used for all packed matmuls / output
ROW_W1 = 0                               # 16 rows  : W1 [16, 128]
ROW_W2 = ROW_W1 + INPUT_DIM              # 16       : W2 [128, 128]
ROW_W3 = ROW_W2 + WIDE                   # 144      : W3 [128, 128]
ROW_B = ROW_W3 + WIDE                    # 272      : b1, b2, b3 rows
R_SLAB = ((ROW_B + 3 + 7) // 8) * 8      # 280 (sublane-aligned pad)

# init_const = 1 / softplus(init_std - min_std)  (Python scalar, baked in)
INIT_CONST = float(1.0 / math.log1p(math.exp(INIT_STD - MIN_STD)))


# ---------------- Pallas kernel ----------------
def ppo_kernel(x_ref, p_ref, out_ref):
    x = x_ref[...]                                        # [B, 16]

    # --- BatchNorm1d(inp_dim, affine=False), training mode: batch stats.
    #     Two-pass biased variance (plain sublane reductions).
    mean = jnp.mean(x, axis=0, keepdims=True)             # [1, 16]
    xc = x - mean
    var = jnp.mean(xc * xc, axis=0, keepdims=True)        # [1, 16]
    xn = xc * jax.lax.rsqrt(var + BN_EPS)

    # --- static, sublane-aligned, full-lane-width slices of the parameter slab
    w1 = p_ref[ROW_W1:ROW_W1 + INPUT_DIM, :]              # [16, 128]
    w2 = p_ref[ROW_W2:ROW_W2 + WIDE, :]                   # [128, 128]
    w3 = p_ref[ROW_W3:ROW_W3 + WIDE, :]                   # [128, 128]
    b = p_ref[ROW_B:R_SLAB, :]                            # [8, 128] aligned tile
    b1 = b[0:1, :]
    b2 = b[1:2, :]
    b3 = b[2:3, :]

    # --- fused critic+actor towers: 3 matmuls, 2 tanh (padded lanes stay 0) ---
    h1 = jnp.tanh(jnp.dot(xn, w1, preferred_element_type=jnp.float32) + b1)
    h2 = jnp.tanh(jnp.dot(h1, w2, preferred_element_type=jnp.float32) + b2)
    # [B, 128] lane-dense slab: cols 0:A = mu, col A = value, rest zero
    out_ref[...] = jnp.dot(h2, w3, preferred_element_type=jnp.float32) + b3


# ---------------- parameter packing (done once, outside the kernel) ----------
def pack_params(params):
    (cw0, cb0, cw1, cb1, cwv, cbv,
     aw0, ab0, aw1, ab1, awo, abo, log_std) = params
    A = NUM_ACTIONS

    slab = jnp.zeros((R_SLAB, WIDE), jnp.float32)

    # W1 [16,128]: cols 0:32 critic layer0, cols 32:64 actor layer0
    slab = slab.at[ROW_W1:ROW_W1 + INPUT_DIM, 0:HV0].set(cw0)
    slab = slab.at[ROW_W1:ROW_W1 + INPUT_DIM, HV0:HV0 + HA0].set(aw0)

    # W2 [128,128]: block-diagonal (critic layer1, actor layer1)
    slab = slab.at[ROW_W2:ROW_W2 + HV0, 0:HV1].set(cw1)
    slab = slab.at[ROW_W2 + HV0:ROW_W2 + HV0 + HA0, HV1:HV1 + HA1].set(aw1)

    # W3 [128,128]: critic rows -> value col A, actor rows -> mu cols 0:A
    slab = slab.at[ROW_W3:ROW_W3 + HV1, A:A + 1].set(cwv)
    slab = slab.at[ROW_W3 + HV1:ROW_W3 + HV1 + HA1, 0:A].set(awo)

    # bias rows
    slab = slab.at[ROW_B + 0, 0:HV0].set(cb0[0])
    slab = slab.at[ROW_B + 0, HV0:HV0 + HA0].set(ab0[0])
    slab = slab.at[ROW_B + 1, 0:HV1].set(cb1[0])
    slab = slab.at[ROW_B + 1, HV1:HV1 + HA1].set(ab1[0])
    slab = slab.at[ROW_B + 2, 0:A].set(abo[0])
    slab = slab.at[ROW_B + 2, A].set(cbv[0, 0])

    # std is data-independent -> compute once, outside the kernel
    std_row = jax.nn.softplus(log_std + INIT_CONST) + MIN_STD     # [1, A]

    return slab, std_row


# ---------------- wrapper (jitted: pallas call + slices + std broadcast) -----
def _ppo_forward_impl(x, slab, std_row):
    B = x.shape[0]
    A = NUM_ACTIONS
    flops = 2 * B * (INPUT_DIM * WIDE + WIDE * WIDE + WIDE * WIDE)
    bytes_accessed = 4 * (x.size + slab.size + B * WIDE)
    out = pl.pallas_call(
        ppo_kernel,
        out_shape=jax.ShapeDtypeStruct((B, WIDE), jnp.float32),
        cost_estimate=pl.CostEstimate(
            flops=flops, transcendentals=2 * B * WIDE,
            bytes_accessed=bytes_accessed),
    )(x, slab)
    mu = out[:, :A]
    value = out[:, A:A + 1]
    std = jnp.broadcast_to(std_row, mu.shape)
    return mu, std, value


ppo_forward = jax.jit(_ppo_forward_impl)


# ---------------- deterministic parameter construction ----------------
def init_params(key):
    """Orthogonal(gain=sqrt(2)) weights, zero biases; last actor layer *0.01."""
    ortho = jax.nn.initializers.orthogonal(scale=math.sqrt(2.0))
    keys = jax.random.split(key, 6)

    def linear(k, din, dout):
        w = ortho(k, (din, dout), jnp.float32)     # stored [in, out]
        b = jnp.zeros((1, dout), jnp.float32)
        return w, b

    # critic
    cw0, cb0 = linear(keys[0], INPUT_DIM, HV0)
    cw1, cb1 = linear(keys[1], HV0, HV1)
    cwv, cbv = linear(keys[2], HV1, 1)
    # actor
    aw0, ab0 = linear(keys[3], INPUT_DIM, HA0)
    aw1, ab1 = linear(keys[4], HA0, HA1)
    awo, abo = linear(keys[5], HA1, NUM_ACTIONS)
    # init_last_layers == 'rescaled': actor output layer weights/bias * 0.01
    awo = awo * 0.01
    abo = abo * 0.01
    # log_std parameter: ones(1, A) * init_std
    log_std = jnp.ones((1, NUM_ACTIONS), jnp.float32) * INIT_STD

    return (cw0, cb0, cw1, cb1, cwv, cbv,
            aw0, ab0, aw1, ab1, awo, abo,
            log_std)


# ---------------- pure-JAX reference for sanity ----------------
def ppo_reference(x, params):
    (cw0, cb0, cw1, cb1, cwv, cbv,
     aw0, ab0, aw1, ab1, awo, abo, log_std) = params
    mean = jnp.mean(x, axis=0, keepdims=True)
    var = jnp.mean((x - mean) ** 2, axis=0, keepdims=True)
    xn = (x - mean) / jnp.sqrt(var + BN_EPS)
    h = jnp.tanh(xn @ cw0 + cb0)
    h = jnp.tanh(h @ cw1 + cb1)
    value = h @ cwv + cbv
    a = jnp.tanh(xn @ aw0 + ab0)
    a = jnp.tanh(a @ aw1 + ab1)
    mu = a @ awo + abo
    std = jnp.broadcast_to(jax.nn.softplus(log_std + INIT_CONST) + MIN_STD, mu.shape)
    return mu, std, value


if __name__ == "__main__":
    key = jax.random.PRNGKey(0)
    kx, kp = jax.random.split(key)
    x = jax.random.normal(kx, (BATCH, INPUT_DIM), jnp.float32)
    params = init_params(kp)
    slab, std_row = pack_params(params)

    mu, std, value = ppo_forward(x, slab, std_row)
    jax.block_until_ready((mu, std, value))

    mu_r, std_r, val_r = ppo_reference(x, params)
    np.testing.assert_allclose(np.asarray(mu), np.asarray(mu_r), rtol=1e-4, atol=1e-5)
    np.testing.assert_allclose(np.asarray(std), np.asarray(std_r), rtol=1e-4, atol=1e-5)
    np.testing.assert_allclose(np.asarray(value), np.asarray(val_r), rtol=1e-4, atol=1e-5)

    print("KERNEL_OK")
</pallas_src>

<mosaic_0001>
module attributes {stable_mosaic.version = 11 : i64} {
  func.func @ppo_kernel(%arg0: memref<8x16xf32, #tpu.memory_space<vmem>>, %arg1: memref<280x128xf32, #tpu.memory_space<vmem>>, %arg2: memref<8x128xf32, #tpu.memory_space<vmem>>) attributes {dimension_semantics = [], scalar_prefetch = 0 : i64, scratch_operands = 0 : i64, tpu.core_type = #tpu.core_type<tc>} {
    %c0 = arith.constant 0 : index
    %c0_0 = arith.constant 0 : index
    %0 = vector.load %arg0[%c0, %c0_0] : memref<8x16xf32, #tpu.memory_space<vmem>>, vector<8x16xf32>
    %cst = arith.constant dense<0.000000e+00> : vector<16xf32>
    %1 = vector.multi_reduction <add>, %0, %cst [0] : vector<8x16xf32> to vector<16xf32>
    %2 = vector.shape_cast %1 : vector<16xf32> to vector<1x16xf32>
    %cst_1 = arith.constant 8.000000e+00 : f32
    %3 = vector.broadcast %cst_1 : f32 to vector<1x16xf32>
    %4 = arith.divf %2, %3 : vector<1x16xf32>
    %5 = vector.broadcast %4 : vector<1x16xf32> to vector<8x16xf32>
    %6 = arith.subf %0, %5 : vector<8x16xf32>
    %7 = arith.mulf %6, %6 : vector<8x16xf32>
    %cst_2 = arith.constant dense<0.000000e+00> : vector<16xf32>
    %8 = vector.multi_reduction <add>, %7, %cst_2 [0] : vector<8x16xf32> to vector<16xf32>
    %9 = vector.shape_cast %8 : vector<16xf32> to vector<1x16xf32>
    %cst_3 = arith.constant 8.000000e+00 : f32
    %10 = vector.broadcast %cst_3 : f32 to vector<1x16xf32>
    %11 = arith.divf %9, %10 : vector<1x16xf32>
    %cst_4 = arith.constant 9.99999974E-6 : f32
    %12 = vector.broadcast %cst_4 : f32 to vector<1x16xf32>
    %13 = arith.addf %11, %12 : vector<1x16xf32>
    %14 = math.rsqrt %13 : vector<1x16xf32>
    %15 = vector.broadcast %14 : vector<1x16xf32> to vector<8x16xf32>
    %16 = arith.mulf %6, %15 : vector<8x16xf32>
    %c0_5 = arith.constant 0 : index
    %c0_6 = arith.constant 0 : index
    %17 = vector.load %arg1[%c0_5, %c0_6] : memref<280x128xf32, #tpu.memory_space<vmem>>, vector<16x128xf32>
    %c16 = arith.constant 16 : index
    %c0_7 = arith.constant 0 : index
    %18 = vector.load %arg1[%c16, %c0_7] : memref<280x128xf32, #tpu.memory_space<vmem>>, vector<128x128xf32>
    %c144 = arith.constant 144 : index
    %c0_8 = arith.constant 0 : index
    %19 = vector.load %arg1[%c144, %c0_8] : memref<280x128xf32, #tpu.memory_space<vmem>>, vector<128x128xf32>
    %c272 = arith.constant 272 : index
    %c0_9 = arith.constant 0 : index
    %20 = vector.load %arg1[%c272, %c0_9] : memref<280x128xf32, #tpu.memory_space<vmem>>, vector<8x128xf32>
    %21 = vector.extract_strided_slice %20 {offsets = [0, 0], sizes = [1, 128], strides = [1, 1]} : vector<8x128xf32> to vector<1x128xf32>
    %22 = vector.extract_strided_slice %20 {offsets = [1, 0], sizes = [1, 128], strides = [1, 1]} : vector<8x128xf32> to vector<1x128xf32>
    %23 = vector.extract_strided_slice %20 {offsets = [2, 0], sizes = [1, 128], strides = [1, 1]} : vector<8x128xf32> to vector<1x128xf32>
    %cst_10 = arith.constant dense<0.000000e+00> : vector<8x128xf32>
    %24 = tpu.matmul %16, %17, %cst_10 {dimension_numbers = #tpu.dot_dimension_numbers<[1], [0], [0], [1], [0, 0, 1, 1], [], []>} : vector<8x16xf32>, vector<16x128xf32>, vector<8x128xf32> -> vector<8x128xf32>
    %25 = vector.broadcast %21 : vector<1x128xf32> to vector<8x128xf32>
    %26 = arith.addf %24, %25 : vector<8x128xf32>
    %27 = math.tanh %26 : vector<8x128xf32>
    %cst_11 = arith.constant dense<0.000000e+00> : vector<8x128xf32>
    %28 = tpu.matmul %27, %18, %cst_11 {dimension_numbers = #tpu.dot_dimension_numbers<[1], [0], [0], [1], [0, 0, 1, 1], [], []>} : vector<8x128xf32>, vector<128x128xf32>, vector<8x128xf32> -> vector<8x128xf32>
    %29 = vector.broadcast %22 : vector<1x128xf32> to vector<8x128xf32>
    %30 = arith.addf %28, %29 : vector<8x128xf32>
    %31 = math.tanh %30 : vector<8x128xf32>
    %cst_12 = arith.constant dense<0.000000e+00> : vector<8x128xf32>
    %32 = tpu.matmul %31, %19, %cst_12 {dimension_numbers = #tpu.dot_dimension_numbers<[1], [0], [0], [1], [0, 0, 1, 1], [], []>} : vector<8x128xf32>, vector<128x128xf32>, vector<8x128xf32> -> vector<8x128xf32>
    %33 = vector.broadcast %23 : vector<1x128xf32> to vector<8x128xf32>
    %34 = arith.addf %32, %33 : vector<8x128xf32>
    %c0_13 = arith.constant 0 : index
    %c0_14 = arith.constant 0 : index
    %35 = vector.load %arg2[%c0_13, %c0_14] : memref<8x128xf32, #tpu.memory_space<vmem>>, vector<8x128xf32>
    tpu.vector_store %arg2[%c0_13, %c0_14], %34 {strides = array<i32>} : memref<8x128xf32, #tpu.memory_space<vmem>>, vector<8x128xf32>,
    return
  }
}

</mosaic_0001>

<llo_original>
// kernel: _ppo_forward_impl.1
$region0: #{_ppo_forward_impl.1}
  #allocation0 [shape = 'u32[]', space=smem, size = 0x4, offset = 0x4, fixed_abs, tag = 'smem constant byte address 0x4 - core index']
  #allocation1 [shape = 'u32[144,128]{1,0:T(1,128)}', space=vmem, size = 0x12000, scoped, tag = 'internal scratch']
  %s0 = inlined_call_operand.hbm [shape: f32[8,16], index: 0, kind: input, shape index: {}]
  %s1 = inlined_call_operand.hbm [shape: f32[280,128], index: 1, kind: input, shape index: {}]
  %s2 = inlined_call_operand.vmem [shape: f32[8,128], index: 2, kind: output, shape index: {}]
  %s3 = sld [smem:[#allocation0]]
  $region26: #{_ppo_forward_impl.1} parent=0
    _
  %s5 = ssub.s32 1, %s3
  %s6 = scalar_select 0, %s5, %s3
  $region1: #{_ppo_forward_impl.1} parent=0
    #allocation2 [shape = 'u8[4096]{0}', space=vmem, size = 0x1000, scoped, tag = 'input window, operand 0, single buffered']
    #allocation3 [shape = 's32[1]{0}', space=sflag, size = 0x4, scoped, tag = 'scoped memory for _ppo_forward_impl.1']
    #allocation4 [shape = 'u8[143360]{0}', space=vmem, size = 0x23000, scoped, tag = 'input window, operand 1, single buffered']
    #allocation5 [shape = 's32[1]{0}', space=sflag, size = 0x4, scoped, tag = 'scoped memory for _ppo_forward_impl.1']
    %7 = vsyncpa [#allocation3], 0
    %8 = vsyncpa [#allocation5], 0
    // Predicated region
    $region2: #{_ppo_forward_impl.1} parent=1 // pred_check
      _
    $region3: #{_ppo_forward_impl.1} parent=1 // pred_check_branch
      %10 = sbr.rel (0) target = $region5
    $region4: #{_ppo_forward_impl.1} parent=1 // pred_region
      %s12 = ssub.s32 128, 128
      %13 = vsyncadd [#allocation3], %s12
      %s15 = sshll.u32 [#allocation2], 4
      %s16 = int_to_ptr.vmem [resolvable:$true] %s15
      %18 = dma.hbm_to_vmem [thread:$0]  %s0, 128, %s16, [#allocation3]
    $region5: #{_ppo_forward_impl.1} parent=1 // pred_fallthru
      _
    // Predicated region
    $region6: #{_ppo_forward_impl.1} parent=1 // pred_check
      _
    $region7: #{_ppo_forward_impl.1} parent=1 // pred_check_branch
      %20 = sbr.rel (0) target = $region9
    $region8: #{_ppo_forward_impl.1} parent=1 // pred_region
      %s22 = ssub.s32 4480, 4480
      %23 = vsyncadd [#allocation5], %s22
      %s24 = sshll.u32 [#allocation4], 4
      %s25 = int_to_ptr.vmem [resolvable:$true] %s24
      %30 = dma.hbm_to_vmem [thread:$0]  %s1, 4480, %s25, [#allocation5], 128, 128, 8
    $region9: #{_ppo_forward_impl.1} parent=1 // pred_fallthru
      _
    // Predicated region
    $region10: #{_ppo_forward_impl.1} parent=1 // pred_check
      _
    $region11: #{_ppo_forward_impl.1} parent=1 // pred_check_branch
      %32 = sbr.rel (0) target = $region13
    $region12: #{_ppo_forward_impl.1} parent=1 // pred_region
      %33 = dma.done [#allocation3], 128
    $region13: #{_ppo_forward_impl.1} parent=1 // pred_fallthru
      _
    // Predicated region
    $region14: #{_ppo_forward_impl.1} parent=1 // pred_check
      _
    $region15: #{_ppo_forward_impl.1} parent=1 // pred_check_branch
      %35 = sbr.rel (0) target = $region17
    $region16: #{_ppo_forward_impl.1} parent=1 // pred_region
      %36 = dma.done [#allocation5], 4480
    $region17: #{_ppo_forward_impl.1} parent=1 // pred_fallthru
      _
    %v37 = vld [vmem:[#allocation2] sm:$0xff]
    %vm38 = vcmask 130048
    %v39 = vsel %vm38, %v37, 0.0
    %v40 = vrot.slane %v39, 4
    %v41 = vadd.f32 %v39, %v40
    %v42 = vrot.slane %v41, 2
    %v43 = vadd.f32 %v41, %v42
    %v44 = vrot.slane %v43, 1
    %v45 = vadd.f32 %v43, %v44
    %v46 = vrcp.pop 8.0
    %v47 = vmul.f32 %v45, %v46
    %v48 = vsub.f32 %v37, %v47
    %v49 = vmul.f32 %v48, %v48
    %v50 = vsel %vm38, %v49, 0.0
    %v51 = vrot.slane %v50, 4
    %v52 = vadd.f32 %v50, %v51
    %v53 = vrot.slane %v52, 2
    %v54 = vadd.f32 %v52, %v53
    %v55 = vrot.slane %v54, 1
    %v56 = vadd.f32 %v54, %v55
    %v57 = vmul.f32 %v56, %v46
    %v58 = vadd.f32 %v57, 1e-05
    %v59 = vrsqrt.pop %v58
    %v60 = vmul.f32 %v48, %v59
    %v61 = vld [vmem:[#allocation4] sm:$0xff]
    %v62 = vld [vmem:[#allocation4 + $0x8] sm:$0xff]
    %v63 = vld [vmem:[#allocation4 + $0x10] sm:$0xff]
    %v64 = vld [vmem:[#allocation4 + $0x18] sm:$0xff]
    %v65 = vld [vmem:[#allocation4 + $0x20] sm:$0xff]
    %v66 = vld [vmem:[#allocation4 + $0x28] sm:$0xff]
    %v67 = vld [vmem:[#allocation4 + $0x30] sm:$0xff]
    %v68 = vld [vmem:[#allocation4 + $0x38] sm:$0xff]
    %v69 = vld [vmem:[#allocation4 + $0x40] sm:$0xff]
    %v70 = vld [vmem:[#allocation4 + $0x48] sm:$0xff]
    %v71 = vld [vmem:[#allocation4 + $0x50] sm:$0xff]
    %v72 = vld [vmem:[#allocation4 + $0x58] sm:$0xff]
    %v73 = vld [vmem:[#allocation4 + $0x60] sm:$0xff]
    %v74 = vld [vmem:[#allocation4 + $0x68] sm:$0xff]
    %v75 = vld [vmem:[#allocation4 + $0x70] sm:$0xff]
    %v76 = vld [vmem:[#allocation4 + $0x78] sm:$0xff]
    %v77 = vld [vmem:[#allocation4 + $0x80] sm:$0xff]
    %v78 = vld [vmem:[#allocation4 + $0x88] sm:$0xff]
    %v79 = vld [vmem:[#allocation4 + $0x90] sm:$0xff]
    %v80 = vld [vmem:[#allocation4 + $0x98] sm:$0xff]
    %v81 = vld [vmem:[#allocation4 + $0xa0] sm:$0xff]
    %v82 = vld [vmem:[#allocation4 + $0xa8] sm:$0xff]
    %v83 = vld [vmem:[#allocation4 + $0xb0] sm:$0xff]
    %v84 = vld [vmem:[#allocation4 + $0xb8] sm:$0xff]
    %v85 = vld [vmem:[#allocation4 + $0xc0] sm:$0xff]
    %v86 = vld [vmem:[#allocation4 + $0xc8] sm:$0xff]
    %v87 = vld [vmem:[#allocation4 + $0xd0] sm:$0xff]
    %v88 = vld [vmem:[#allocation4 + $0xd8] sm:$0xff]
    %v89 = vld [vmem:[#allocation4 + $0xe0] sm:$0xff]
    %v90 = vld [vmem:[#allocation4 + $0xe8] sm:$0xff]
    %v91 = vld [vmem:[#allocation4 + $0xf0] sm:$0xff]
    %v92 = vld [vmem:[#allocation4 + $0xf8] sm:$0xff]
    %v93 = vld [vmem:[#allocation4 + $0x100] sm:$0xff]
    %v94 = vld [vmem:[#allocation4 + $0x108] sm:$0xff]
    %v95 = vld [vmem:[#allocation4 + $0x110] sm:$0xff]
    %v96 = vlaneseq
    %v97 = vshrl.u32 %v96, 7
    %v98 = vsub.s32 0, %v97
    %v99 = vrot.slane %v95, %v98
    %v101 = vsel %vm38, %v60, 0
    %103 = vmatprep.subr.mxu0 0.0
    %104 = vmatpush1.msra.mxu0 0.0
    %105 = vmatprep.subr.mxu0 0.0
    %106 = vmatpush1.msra.mxu0 0.0
    %107 = vmatprep.subr.mxu0 0.0
    %108 = vmatpush1.msra.mxu0 0.0
    %109 = vmatprep.subr.mxu0 0.0
    %110 = vmatpush1.msra.mxu0 0.0
    %111 = vmatprep.subr.mxu0 0.0
    %112 = vmatpush1.msra.mxu0 0.0
    %113 = vmatprep.subr.mxu0 0.0
    %114 = vmatpush1.msra.mxu0 0.0
    %115 = vmatprep.subr.mxu0 0.0
    %116 = vmatpush1.msra.mxu0 0.0
    %117 = vmatprep.subr.mxu0 0.0
    %118 = vmatpush1.msra.mxu0 0.0
    %119 = vmatprep.subr.mxu0 0.0
    %120 = vmatpush1.msra.mxu0 0.0
    %121 = vmatprep.subr.mxu0 0.0
    %122 = vmatpush1.msra.mxu0 0.0
    %123 = vmatprep.subr.mxu0 0.0
    %124 = vmatpush1.msra.mxu0 0.0
    %125 = vmatprep.subr.mxu0 0.0
    %126 = vmatpush1.msra.mxu0 0.0
    %127 = vmatprep.subr.mxu0 0.0
    %128 = vmatpush1.msra.mxu0 0.0
    %129 = vmatprep.subr.mxu0 0.0
    %130 = vmatpush1.msra.mxu0 0.0
    %131 = vmatprep.subr.mxu0 0.0
    %132 = vmatpush1.msra.mxu0 %v62
    %133 = vmatprep.subr.mxu0 0.0
    %134 = vmatpush1.msra.mxu0 %v61
    %135 = vmatprep.subr.mxu0 0.0
    %136 = vmatpush2.msra.mxu0 0.0
    %137 = vmatprep.subr.mxu0 0.0
    %138 = vmatpush2.msra.mxu0 0.0
    %139 = vmatprep.subr.mxu0 0.0
    %140 = vmatpush2.msra.mxu0 0.0
    %141 = vmatprep.subr.mxu0 0.0
    %142 = vmatpush2.msra.mxu0 0.0
    %143 = vmatprep.subr.mxu0 0.0
    %144 = vmatpush2.msra.mxu0 0.0
    %145 = vmatprep.subr.mxu0 0.0
    %146 = vmatpush2.msra.mxu0 0.0
    %147 = vmatprep.subr.mxu0 0.0
    %148 = vmatpush2.msra.mxu0 0.0
    %149 = vmatprep.subr.mxu0 0.0
    %150 = vmatpush2.msra.mxu0 0.0
    %151 = vmatprep.subr.mxu0 0.0
    %152 = vmatpush2.msra.mxu0 0.0
    %153 = vmatprep.subr.mxu0 0.0
    %154 = vmatpush2.msra.mxu0 0.0
    %155 = vmatprep.subr.mxu0 0.0
    %156 = vmatpush2.msra.mxu0 0.0
    %157 = vmatprep.subr.mxu0 0.0
    %158 = vmatpush2.msra.mxu0 0.0
    %159 = vmatprep.subr.mxu0 0.0
    %160 = vmatpush2.msra.mxu0 0.0
    %161 = vmatprep.subr.mxu0 0.0
    %162 = vmatpush2.msra.mxu0 0.0
    %163 = vmatprep.subr.mxu0 0.0
    %164 = vmatpush2.msra.mxu0 0.0
    %165 = vmatprep.subr.mxu0 0.0
    %166 = vmatpush2.msra.mxu0 0.0
    %167 = vmatprep.mubr.f32.mxu0 0.0
    %168 = vmatmul.mubr.f32.gmra.mxu0 %v101
    %v169 = vpop.f32.mrf.mxu0
    %v170 = vadd.f32 %v99, %v169
    %v171 = vpop.f32.mrf.mxu0
    %172 = vdwg.mxu0
    %v173 = vtanh.pop %v170
    %v174 = vlaneseq
    %v175 = vshrl.u32 %v174, 7
    %v176 = vsub.s32 1, %v175
    %v177 = vrot.slane %v95, %v176
    %178 = vmatprep.subr.mxu0 0.0
    %179 = vmatpush1.msra.mxu0 %v78
    %180 = vmatprep.subr.mxu0 0.0
    %181 = vmatpush1.msra.mxu0 %v77
    %182 = vmatprep.subr.mxu0 0.0
    %183 = vmatpush1.msra.mxu0 %v76
    %184 = vmatprep.subr.mxu0 0.0
    %185 = vmatpush1.msra.mxu0 %v75
    %186 = vmatprep.subr.mxu0 0.0
    %187 = vmatpush1.msra.mxu0 %v74
    %188 = vmatprep.subr.mxu0 0.0
    %189 = vmatpush1.msra.mxu0 %v73
    %190 = vmatprep.subr.mxu0 0.0
    %191 = vmatpush1.msra.mxu0 %v72
    %192 = vmatprep.subr.mxu0 0.0
    %193 = vmatpush1.msra.mxu0 %v71
    %194 = vmatprep.subr.mxu0 0.0
    %195 = vmatpush1.msra.mxu0 %v70
    %196 = vmatprep.subr.mxu0 0.0
    %197 = vmatpush1.msra.mxu0 %v69
    %198 = vmatprep.subr.mxu0 0.0
    %199 = vmatpush1.msra.mxu0 %v68
    %200 = vmatprep.subr.mxu0 0.0
    %201 = vmatpush1.msra.mxu0 %v67
    %202 = vmatprep.subr.mxu0 0.0
    %203 = vmatpush1.msra.mxu0 %v66
    %204 = vmatprep.subr.mxu0 0.0
    %205 = vmatpush1.msra.mxu0 %v65
    %206 = vmatprep.subr.mxu0 0.0
    %207 = vmatpush1.msra.mxu0 %v64
    %208 = vmatprep.subr.mxu0 0.0
    %209 = vmatpush1.msra.mxu0 %v63
    %210 = vmatprep.subr.mxu0 0.0
    %211 = vmatpush2.msra.mxu0 0.0
    %212 = vmatprep.subr.mxu0 0.0
    %213 = vmatpush2.msra.mxu0 0.0
    %214 = vmatprep.subr.mxu0 0.0
    %215 = vmatpush2.msra.mxu0 0.0
    %216 = vmatprep.subr.mxu0 0.0
    %217 = vmatpush2.msra.mxu0 0.0
    %218 = vmatprep.subr.mxu0 0.0
    %219 = vmatpush2.msra.mxu0 0.0
    %220 = vmatprep.subr.mxu0 0.0
    %221 = vmatpush2.msra.mxu0 0.0
    %222 = vmatprep.subr.mxu0 0.0
    %223 = vmatpush2.msra.mxu0 0.0
    %224 = vmatprep.subr.mxu0 0.0
    %225 = vmatpush2.msra.mxu0 0.0
    %226 = vmatprep.subr.mxu0 0.0
    %227 = vmatpush2.msra.mxu0 0.0
    %228 = vmatprep.subr.mxu0 0.0
    %229 = vmatpush2.msra.mxu0 0.0
    %230 = vmatprep.subr.mxu0 0.0
    %231 = vmatpush2.msra.mxu0 0.0
    %232 = vmatprep.subr.mxu0 0.0
    %233 = vmatpush2.msra.mxu0 0.0
    %234 = vmatprep.subr.mxu0 0.0
    %235 = vmatpush2.msra.mxu0 0.0
    %236 = vmatprep.subr.mxu0 0.0
    %237 = vmatpush2.msra.mxu0 0.0
    %238 = vmatprep.subr.mxu0 0.0
    %239 = vmatpush2.msra.mxu0 0.0
    %240 = vmatprep.subr.mxu0 0.0
    %241 = vmatpush2.msra.mxu0 0.0
    %242 = vmatprep.mubr.f32.mxu0 0.0
    %243 = vmatmul.mubr.f32.gmra.mxu0 %v173
    %v244 = vpop.f32.mrf.mxu0
    %v245 = vadd.f32 %v177, %v244
    %v246 = vpop.f32.mrf.mxu0
    %247 = vdwg.mxu0
    %v248 = vtanh.pop %v245
    %v249 = vlaneseq
    %v250 = vshrl.u32 %v249, 7
    %v251 = vsub.s32 2, %v250
    %v252 = vrot.slane %v95, %v251
    %253 = vmatprep.subr.mxu0 0.0
    %254 = vmatpush1.msra.mxu0 %v94
    %255 = vmatprep.subr.mxu0 0.0
    %256 = vmatpush1.msra.mxu0 %v93
    %257 = vmatprep.subr.mxu0 0.0
    %258 = vmatpush1.msra.mxu0 %v92
    %259 = vmatprep.subr.mxu0 0.0
    %260 = vmatpush1.msra.mxu0 %v91
    %261 = vmatprep.subr.mxu0 0.0
    %262 = vmatpush1.msra.mxu0 %v90
    %263 = vmatprep.subr.mxu0 0.0
    %264 = vmatpush1.msra.mxu0 %v89
    %265 = vmatprep.subr.mxu0 0.0
    %266 = vmatpush1.msra.mxu0 %v88
    %267 = vmatprep.subr.mxu0 0.0
    %268 = vmatpush1.msra.mxu0 %v87
    %269 = vmatprep.subr.mxu0 0.0
    %270 = vmatpush1.msra.mxu0 %v86
    %271 = vmatprep.subr.mxu0 0.0
    %272 = vmatpush1.msra.mxu0 %v85
    %273 = vmatprep.subr.mxu0 0.0
    %274 = vmatpush1.msra.mxu0 %v84
    %275 = vmatprep.subr.mxu0 0.0
    %276 = vmatpush1.msra.mxu0 %v83
    %277 = vmatprep.subr.mxu0 0.0
    %278 = vmatpush1.msra.mxu0 %v82
    %279 = vmatprep.subr.mxu0 0.0
    %280 = vmatpush1.msra.mxu0 %v81
    %281 = vmatprep.subr.mxu0 0.0
    %282 = vmatpush1.msra.mxu0 %v80
    %283 = vmatprep.subr.mxu0 0.0
    %284 = vmatpush1.msra.mxu0 %v79
    %285 = vmatprep.subr.mxu0 0.0
    %286 = vmatpush2.msra.mxu0 0.0
    %287 = vmatprep.subr.mxu0 0.0
    %288 = vmatpush2.msra.mxu0 0.0
    %289 = vmatprep.subr.mxu0 0.0
    %290 = vmatpush2.msra.mxu0 0.0
    %291 = vmatprep.subr.mxu0 0.0
    %292 = vmatpush2.msra.mxu0 0.0
    %293 = vmatprep.subr.mxu0 0.0
    %294 = vmatpush2.msra.mxu0 0.0
    %295 = vmatprep.subr.mxu0 0.0
    %296 = vmatpush2.msra.mxu0 0.0
    %297 = vmatprep.subr.mxu0 0.0
    %298 = vmatpush2.msra.mxu0 0.0
    %299 = vmatprep.subr.mxu0 0.0
    %300 = vmatpush2.msra.mxu0 0.0
    %301 = vmatprep.subr.mxu0 0.0
    %302 = vmatpush2.msra.mxu0 0.0
    %303 = vmatprep.subr.mxu0 0.0
    %304 = vmatpush2.msra.mxu0 0.0
    %305 = vmatprep.subr.mxu0 0.0
    %306 = vmatpush2.msra.mxu0 0.0
    %307 = vmatprep.subr.mxu0 0.0
    %308 = vmatpush2.msra.mxu0 0.0
    %309 = vmatprep.subr.mxu0 0.0
    %310 = vmatpush2.msra.mxu0 0.0
    %311 = vmatprep.subr.mxu0 0.0
    %312 = vmatpush2.msra.mxu0 0.0
    %313 = vmatprep.subr.mxu0 0.0
    %314 = vmatpush2.msra.mxu0 0.0
    %315 = vmatprep.subr.mxu0 0.0
    %316 = vmatpush2.msra.mxu0 0.0
    %317 = vmatprep.mubr.f32.mxu0 0.0
    %318 = vmatmul.mubr.f32.gmra.mxu0 %v248
    %v319 = vpop.f32.mrf.mxu0
    %v320 = vadd.f32 %v252, %v319
    %v321 = vpop.f32.mrf.mxu0
    %322 = vdwg.mxu0
    %323 = vst [vmem:[%s2] sm:$0xff] %v320
    // Predicated region
    $region18: #{_ppo_forward_impl.1} parent=1 // pred_check
      _
    $region19: #{_ppo_forward_impl.1} parent=1 // pred_check_branch
      %325 = sbr.rel (0) target = $region21
    $region20: #{_ppo_forward_impl.1} parent=1 // pred_region
      _
    $region21: #{_ppo_forward_impl.1} parent=1 // pred_fallthru
      _
    // Predicated region
    $region22: #{_ppo_forward_impl.1} parent=1 // pred_check
      _
    $region23: #{_ppo_forward_impl.1} parent=1 // pred_check_branch
      %327 = sbr.rel (0) target = $region25
    $region24: #{_ppo_forward_impl.1} parent=1 // pred_region
      _
    $region25: #{_ppo_forward_impl.1} parent=1 // pred_fallthru
      _
    %328 = vsyncpa [#allocation3], 1
    %329 = vsyncpa [#allocation5], 1

</llo_original>
